<compile_context>
chip_gen: v6e
topology: v6e:2x2x1
jax: 0.10.0
libtpu: 0.0.40
codegen_flags: <defaults>
</compile_context>

<pallas_src>
import functools
import math

import jax
import jax.numpy as jnp
import numpy as np
from jax.experimental import pallas as pl
from jax.experimental.pallas import tpu as pltpu


def _round_up(x, m):
    return ((x + m - 1) // m) * m


# ----------------------------- Pallas kernel ------------------------------ #

def _fused_ensemble_mlp_kernel(x_ref, *refs, num_layers, compute_dtype):
    """Fused EnsembleMLP forward (all ensembles) for one batch tile.

    x_ref : (Bt, E*Din)        batch-major concatenated [states, actions]
    refs  : [W_bd_0, b_0, W_bd_1, b_1, ..., W_bd_last(pad), b_last(pad), o_ref]
            W_bd_l : (E*din_l, E*dout_l) block-diagonal weight (last layer
                     zero-padded to a multiple of 128 output lanes)
            b_l    : (1, E*dout_l) concatenated bias (f32)
    o_ref : (Bt, lane_out) lane-dense output slab.
    """
    o_ref = refs[-1]
    p = refs[:-1]

    h = x_ref[...]
    for l in range(num_layers):
        w = p[2 * l][...]
        b = p[2 * l + 1][...]
        # One block-diagonal matmul per layer; f32 accumulation on the MXU.
        h = jnp.dot(h.astype(compute_dtype), w,
                    preferred_element_type=jnp.float32) + b
        if l < num_layers - 1:          # tanh after hidden layers only
            h = jnp.tanh(h)
    o_ref[...] = h.astype(o_ref.dtype)


# ------------------------------ Fused wrapper ------------------------------ #

def _block_diag(w):
    """(E, din, dout) -> (E*din, E*dout) block-diagonal weight."""
    E, din, dout = w.shape
    eye = jnp.eye(E, dtype=w.dtype)
    return jnp.einsum("eio,ef->eifo", w, eye).reshape(E * din, E * dout)


def fused_ensemble_mlp(params, states, actions, *, max_batch_tile=2048,
                       use_bf16=False):
    """states/actions: (B, E, feat). Returns (B, E, out_dim) MLP output."""
    B, E, Sd = states.shape
    Ad = actions.shape[-1]
    Din = Sd + Ad
    dtype = states.dtype

    layers = params["layers"]                     # list of (weight, bias)
    w_last, b_last = params["last_layer"]
    out_dim = w_last.shape[-1]

    # Concat in the wrapper (trivial copy), then a pure batch-major reshape.
    x2 = jnp.concatenate([states, actions], axis=-1).reshape(B, E * Din)

    all_layers = list(layers) + [(w_last, b_last)]
    num_layers = len(all_layers)
    lane_out = _round_up(E * out_dim, 128)        # packed, lane-dense output

    compute_dtype = jnp.bfloat16 if use_bf16 else jnp.float32

    # Block-diagonal parameters (built once; constant index_map -> VMEM-resident).
    param_arrays = []
    for li, (w, b) in enumerate(all_layers):
        wb = _block_diag(w)                       # (E*din, E*dout)
        bb = b.reshape(1, -1).astype(jnp.float32)  # (1, E*dout), bias adds in f32
        if li == num_layers - 1:
            pad = lane_out - wb.shape[-1]
            wb = jnp.pad(wb, ((0, 0), (0, pad)))
            bb = jnp.pad(bb, ((0, 0), (0, pad)))
        param_arrays += [wb.astype(compute_dtype), bb]

    if use_bf16:
        x2 = x2.astype(jnp.bfloat16)              # halves input DMA bytes

    # Batch tiling: multiple of 8 sublanes, capped; for large B make sure the
    # grid has >= 2 steps so v7x megacore (2 TCs) actually splits the work.
    tile_b = min(max_batch_tile, _round_up(B, 8))
    if tile_b > 512 and _round_up(B, tile_b) // tile_b < 2:
        tile_b = _round_up((tile_b + 1) // 2, 8)
    b_pad = _round_up(B, tile_b)
    if b_pad != B:
        x2 = jnp.pad(x2, ((0, b_pad - B), (0, 0)))

    const_map = lambda i: (0, 0)                  # weights resident in VMEM
    in_specs = [pl.BlockSpec((tile_b, E * Din), lambda i: (i, 0))] + \
               [pl.BlockSpec(arr.shape, const_map) for arr in param_arrays]

    out = pl.pallas_call(
        functools.partial(_fused_ensemble_mlp_kernel,
                          num_layers=num_layers, compute_dtype=compute_dtype),
        out_shape=jax.ShapeDtypeStruct((b_pad, lane_out), dtype),
        grid=(b_pad // tile_b,),
        in_specs=in_specs,
        out_specs=pl.BlockSpec((tile_b, lane_out), lambda i: (i, 0)),
        compiler_params=pltpu.CompilerParams(
            dimension_semantics=("parallel",),
            vmem_limit_bytes=48 * 1024 * 1024),
    )(x2, *param_arrays)

    # Drop batch padding and zero lane-padding; unpack ensembles from lanes.
    return out[:B, :E * out_dim].reshape(B, E, out_dim)   # (B, E, out_dim)


# --------------------------- Parameter creation ---------------------------- #

def init_ensemble_layer(key, ensemble_size, in_features, out_features):
    """Matches EnsembleLayer.reset_parameters: U(-sqrt(1/in), sqrt(1/in))."""
    bound = math.sqrt(1.0 / in_features)
    kw, kb = jax.random.split(key)
    weight = jax.random.uniform(
        kw, (ensemble_size, in_features, out_features),
        minval=-bound, maxval=bound, dtype=jnp.float32)
    bias = jax.random.uniform(
        kb, (ensemble_size, out_features),
        minval=-bound, maxval=bound, dtype=jnp.float32)
    return weight, bias


def init_ensemble_model(key, state_dim, action_dim, reward_dim, hidden_dims,
                        output_state_dim=None, ensemble_size=7):
    input_dim = state_dim + action_dim
    output_state_dim = output_state_dim or state_dim
    output_dim = (output_state_dim + reward_dim) * 2
    sizes = [input_dim] + list(hidden_dims)
    params = {"layers": [], "last_layer": None,
              "output_state_dim": output_state_dim,
              "ensemble_size": ensemble_size}
    keys = jax.random.split(key, len(sizes))
    for i in range(len(sizes) - 1):
        params["layers"].append(
            init_ensemble_layer(keys[i], ensemble_size, sizes[i], sizes[i + 1]))
    params["last_layer"] = init_ensemble_layer(
        keys[-1], ensemble_size, sizes[-1], output_dim)
    return params


# ------------------------------- Forward pass ------------------------------ #

def ensemble_model_forward(params, states, actions, *, use_bf16=False):
    """states: (B, E, state_dim), actions: (B, E, action_dim).

    Returns a list (len = ensemble_size) of dicts with 'diff_states' and
    'rewards', matching EnsembleModel.forward.
    """
    out = fused_ensemble_mlp(params, states, actions,
                             use_bf16=use_bf16)          # (B, E, out_dim)
    osd2 = params["output_state_dim"] * 2
    return [{"diff_states": out[:, i, :osd2], "rewards": out[:, i, osd2:]}
            for i in range(params["ensemble_size"])]


# Pure-JAX reference (mirrors the PyTorch einsum) for a correctness check.
def _reference_forward(params, states, actions):
    x = jnp.concatenate([states, actions], axis=-1)      # (B, E, Din)
    for w, b in params["layers"]:
        x = jnp.einsum("abc,bcd->abd", x, w) + b
        x = jnp.tanh(x)
    w, b = params["last_layer"]
    x = jnp.einsum("abc,bcd->abd", x, w) + b
    return x


# ----------------------------------- Main ---------------------------------- #

if __name__ == "__main__":
    state_dim, action_dim, reward_dim = 6, 3, 1
    hidden_dims = [32, 32]
    ensemble_size = 7
    batch = 8

    key = jax.random.PRNGKey(0)
    kparam, ks, ka = jax.random.split(key, 3)

    params = init_ensemble_model(
        kparam, state_dim, action_dim, reward_dim, hidden_dims,
        ensemble_size=ensemble_size)

    states = jax.random.normal(ks, (batch, ensemble_size, state_dim),
                               dtype=jnp.float32)
    actions = jax.random.normal(ka, (batch, ensemble_size, action_dim),
                                dtype=jnp.float32)

    outputs = ensemble_model_forward(params, states, actions)
    jax.block_until_ready(outputs)

    # Sanity check against the pure-JAX einsum reference (f32 path).
    ref = _reference_forward(params, states, actions)
    osd2 = params["output_state_dim"] * 2
    for i, d in enumerate(outputs):
        np.testing.assert_allclose(np.asarray(d["diff_states"]),
                                   np.asarray(ref[:, i, :osd2]),
                                   rtol=1e-5, atol=1e-5)
        np.testing.assert_allclose(np.asarray(d["rewards"]),
                                   np.asarray(ref[:, i, osd2:]),
                                   rtol=1e-5, atol=1e-5)

    print("KERNEL_OK")
</pallas_src>

<mosaic_0001>
module attributes {stable_mosaic.version = 11 : i64} {
  func.func @_fused_ensemble_mlp_kernel(%arg0: i32, %arg1: memref<8x63xf32, #tpu.memory_space<vmem>>, %arg2: memref<63x224xf32, #tpu.memory_space<vmem>>, %arg3: memref<1x224xf32, #tpu.memory_space<vmem>>, %arg4: memref<224x224xf32, #tpu.memory_space<vmem>>, %arg5: memref<1x224xf32, #tpu.memory_space<vmem>>, %arg6: memref<224x128xf32, #tpu.memory_space<vmem>>, %arg7: memref<1x128xf32, #tpu.memory_space<vmem>>, %arg8: memref<8x128xf32, #tpu.memory_space<vmem>>) attributes {dimension_semantics = [#tpu.dimension_semantics<parallel>], iteration_bounds = array<i64: 1>, scalar_prefetch = 0 : i64, scratch_operands = 0 : i64, tpu.core_type = #tpu.core_type<tc>, window_params = [{transform_indices = @transform_0, window_bounds = array<i64: 8, 63>}, {pipeline_mode = #tpu.pipeline_mode<synchronous>, transform_indices = @transform_1, window_bounds = array<i64: 63, 224>}, {pipeline_mode = #tpu.pipeline_mode<synchronous>, transform_indices = @transform_2, window_bounds = array<i64: 1, 224>}, {pipeline_mode = #tpu.pipeline_mode<synchronous>, transform_indices = @transform_3, window_bounds = array<i64: 224, 224>}, {pipeline_mode = #tpu.pipeline_mode<synchronous>, transform_indices = @transform_4, window_bounds = array<i64: 1, 224>}, {pipeline_mode = #tpu.pipeline_mode<synchronous>, transform_indices = @transform_5, window_bounds = array<i64: 224, 128>}, {pipeline_mode = #tpu.pipeline_mode<synchronous>, transform_indices = @transform_6, window_bounds = array<i64: 1, 128>}, {transform_indices = @transform_7, window_bounds = array<i64: 8, 128>}]} {
    %c0 = arith.constant 0 : index
    %c0_0 = arith.constant 0 : index
    %0 = vector.load %arg1[%c0, %c0_0] : memref<8x63xf32, #tpu.memory_space<vmem>>, vector<8x63xf32>
    %c0_1 = arith.constant 0 : index
    %c0_2 = arith.constant 0 : index
    %1 = vector.load %arg2[%c0_1, %c0_2] : memref<63x224xf32, #tpu.memory_space<vmem>>, vector<63x224xf32>
    %c0_3 = arith.constant 0 : index
    %c0_4 = arith.constant 0 : index
    %2 = vector.load %arg3[%c0_3, %c0_4] : memref<1x224xf32, #tpu.memory_space<vmem>>, vector<1x224xf32>
    %cst = arith.constant dense<0.000000e+00> : vector<8x224xf32>
    %3 = tpu.matmul %0, %1, %cst {dimension_numbers = #tpu.dot_dimension_numbers<[1], [0], [0], [1], [0, 0, 1, 1], [], []>} : vector<8x63xf32>, vector<63x224xf32>, vector<8x224xf32> -> vector<8x224xf32>
    %4 = vector.broadcast %2 : vector<1x224xf32> to vector<8x224xf32>
    %5 = arith.addf %3, %4 : vector<8x224xf32>
    %6 = math.tanh %5 : vector<8x224xf32>
    %c0_5 = arith.constant 0 : index
    %c0_6 = arith.constant 0 : index
    %7 = vector.load %arg4[%c0_5, %c0_6] : memref<224x224xf32, #tpu.memory_space<vmem>>, vector<224x224xf32>
    %c0_7 = arith.constant 0 : index
    %c0_8 = arith.constant 0 : index
    %8 = vector.load %arg5[%c0_7, %c0_8] : memref<1x224xf32, #tpu.memory_space<vmem>>, vector<1x224xf32>
    %cst_9 = arith.constant dense<0.000000e+00> : vector<8x224xf32>
    %9 = tpu.matmul %6, %7, %cst_9 {dimension_numbers = #tpu.dot_dimension_numbers<[1], [0], [0], [1], [0, 0, 1, 1], [], []>} : vector<8x224xf32>, vector<224x224xf32>, vector<8x224xf32> -> vector<8x224xf32>
    %10 = vector.broadcast %8 : vector<1x224xf32> to vector<8x224xf32>
    %11 = arith.addf %9, %10 : vector<8x224xf32>
    %12 = math.tanh %11 : vector<8x224xf32>
    %c0_10 = arith.constant 0 : index
    %c0_11 = arith.constant 0 : index
    %13 = vector.load %arg6[%c0_10, %c0_11] : memref<224x128xf32, #tpu.memory_space<vmem>>, vector<224x128xf32>
    %c0_12 = arith.constant 0 : index
    %c0_13 = arith.constant 0 : index
    %14 = vector.load %arg7[%c0_12, %c0_13] : memref<1x128xf32, #tpu.memory_space<vmem>>, vector<1x128xf32>
    %cst_14 = arith.constant dense<0.000000e+00> : vector<8x128xf32>
    %15 = tpu.matmul %12, %13, %cst_14 {dimension_numbers = #tpu.dot_dimension_numbers<[1], [0], [0], [1], [0, 0, 1, 1], [], []>} : vector<8x224xf32>, vector<224x128xf32>, vector<8x128xf32> -> vector<8x128xf32>
    %16 = vector.broadcast %14 : vector<1x128xf32> to vector<8x128xf32>
    %17 = arith.addf %15, %16 : vector<8x128xf32>
    %c0_15 = arith.constant 0 : index
    %c0_16 = arith.constant 0 : index
    %18 = vector.load %arg8[%c0_15, %c0_16] : memref<8x128xf32, #tpu.memory_space<vmem>>, vector<8x128xf32>
    tpu.vector_store %arg8[%c0_15, %c0_16], %17 {strides = array<i32>} : memref<8x128xf32, #tpu.memory_space<vmem>>, vector<8x128xf32>,
    return
  }
  func.func @transform_0(%arg0: i32) -> (i32, i32) {
    %c0_i32 = arith.constant 0 : i32
    %c0_i32_0 = arith.constant 0 : i32
    return %arg0, %c0_i32 : i32, i32
  }
  func.func @transform_1(%arg0: i32) -> (i32, i32) {
    %c0_i32 = arith.constant 0 : i32
    %c0_i32_0 = arith.constant 0 : i32
    %c0_i32_1 = arith.constant 0 : i32
    return %c0_i32, %c0_i32_0 : i32, i32
  }
  func.func @transform_2(%arg0: i32) -> (i32, i32) {
    %c0_i32 = arith.constant 0 : i32
    %c0_i32_0 = arith.constant 0 : i32
    %c0_i32_1 = arith.constant 0 : i32
    return %c0_i32, %c0_i32_0 : i32, i32
  }
  func.func @transform_3(%arg0: i32) -> (i32, i32) {
    %c0_i32 = arith.constant 0 : i32
    %c0_i32_0 = arith.constant 0 : i32
    %c0_i32_1 = arith.constant 0 : i32
    return %c0_i32, %c0_i32_0 : i32, i32
  }
  func.func @transform_4(%arg0: i32) -> (i32, i32) {
    %c0_i32 = arith.constant 0 : i32
    %c0_i32_0 = arith.constant 0 : i32
    %c0_i32_1 = arith.constant 0 : i32
    return %c0_i32, %c0_i32_0 : i32, i32
  }
  func.func @transform_5(%arg0: i32) -> (i32, i32) {
    %c0_i32 = arith.constant 0 : i32
    %c0_i32_0 = arith.constant 0 : i32
    %c0_i32_1 = arith.constant 0 : i32
    return %c0_i32, %c0_i32_0 : i32, i32
  }
  func.func @transform_6(%arg0: i32) -> (i32, i32) {
    %c0_i32 = arith.constant 0 : i32
    %c0_i32_0 = arith.constant 0 : i32
    %c0_i32_1 = arith.constant 0 : i32
    return %c0_i32, %c0_i32_0 : i32, i32
  }
  func.func @transform_7(%arg0: i32) -> (i32, i32) {
    %c0_i32 = arith.constant 0 : i32
    %c0_i32_0 = arith.constant 0 : i32
    return %arg0, %c0_i32 : i32, i32
  }
}

</mosaic_0001>

<llo_original>
// kernel: tpu_custom_call.1
$region0: #{tpu_custom_call.1}
  #allocation0 [shape = 'u32[]', space=smem, size = 0x4, offset = 0x4, fixed_abs, tag = 'smem constant byte address 0x4 - core index']
  #allocation1 [shape = 'u32[144,128]{1,0:T(1,128)}', space=vmem, size = 0x12000, scoped, tag = 'internal scratch']
  %s0 = inlined_call_operand.hbm [shape: f32[8,63], index: 0, kind: input, shape index: {}]
  %s1 = inlined_call_operand.hbm [shape: f32[63,224], index: 1, kind: input, shape index: {}]
  %s2 = inlined_call_operand.vmem [shape: f32[1,224], index: 2, kind: input, shape index: {}]
  %s3 = inlined_call_operand.hbm [shape: f32[224,224], index: 3, kind: input, shape index: {}]
  %s4 = inlined_call_operand.vmem [shape: f32[1,224], index: 4, kind: input, shape index: {}]
  %s5 = inlined_call_operand.hbm [shape: f32[224,128], index: 5, kind: input, shape index: {}]
  %s6 = inlined_call_operand.vmem [shape: f32[1,128], index: 6, kind: input, shape index: {}]
  %s7 = inlined_call_operand.hbm [shape: f32[8,128], index: 7, kind: output, shape index: {}]
  %s8 = sld [smem:[#allocation0]]
  $region54: #{tpu_custom_call.1} parent=0
    _
  %s10 = ssub.s32 1, %s8
  %s11 = scalar_select 0, %s10, %s8
  $region1: #{tpu_custom_call.1} parent=0
    #allocation2 [shape = 'u8[4096]{0}', space=vmem, size = 0x1000, scoped, tag = 'input window, operand 0, single buffered']
    #allocation3 [shape = 's32[1]{0}', space=sflag, size = 0x4, scoped, tag = 'scoped memory for tpu_custom_call.1']
    #allocation4 [shape = 's32[1]{0}', space=sflag, size = 0x4, scoped, tag = 'scoped memory for tpu_custom_call.1']
    #allocation5 [shape = 'u8[65536]{0}', space=vmem, size = 0x10000, scoped, tag = 'input window, operand 1, single buffered']
    #allocation6 [shape = 's32[1]{0}', space=sflag, size = 0x4, scoped, tag = 'scoped memory for tpu_custom_call.1']
    #allocation7 [shape = 'u8[229376]{0}', space=vmem, size = 0x38000, scoped, tag = 'input window, operand 3, single buffered']
    #allocation8 [shape = 'u8[114688]{0}', space=vmem, size = 0x1c000, scoped, tag = 'input window, operand 5, single buffered']
    #allocation9 [shape = 's32[1]{0}', space=sflag, size = 0x4, scoped, tag = 'scoped memory for tpu_custom_call.1']
    #allocation10 [shape = 'u8[4096]{0}', space=vmem, size = 0x1000, scoped, tag = 'output window, operand 0, single buffered']
    %12 = vsyncpa [#allocation3], 0
    %13 = vsyncpa [#allocation6], 0
    %14 = vsyncpa [#allocation9], 0
    %15 = vsyncpa [#allocation4], 0
    // Predicated region
    $region2: #{tpu_custom_call.1} parent=1 // pred_check
      _
    $region3: #{tpu_custom_call.1} parent=1 // pred_check_branch
      %17 = sbr.rel (0) target = $region5
    $region4: #{tpu_custom_call.1} parent=1 // pred_region
      %s19 = ssub.s32 128, 128
      %20 = vsyncadd [#allocation3], %s19
      %s22 = sshll.u32 [#allocation2], 4
      %s23 = int_to_ptr.vmem [resolvable:$true] %s22
      %25 = dma.hbm_to_vmem [thread:$0]  %s0, 128, %s23, [#allocation3]
    $region5: #{tpu_custom_call.1} parent=1 // pred_fallthru
      _
    // Predicated region
    $region6: #{tpu_custom_call.1} parent=1 // pred_check
      _
    $region7: #{tpu_custom_call.1} parent=1 // pred_check_branch
      %27 = sbr.rel (0) target = $region9
    $region8: #{tpu_custom_call.1} parent=1 // pred_region
      %s29 = ssub.s32 2048, 2048
      %30 = vsyncadd [#allocation6], %s29
      %s31 = sshll.u32 [#allocation5], 4
      %s32 = int_to_ptr.vmem [resolvable:$true] %s31
      %37 = dma.hbm_to_vmem [thread:$0]  %s1, 2048, %s32, [#allocation6], 256, 256, 16
    $region9: #{tpu_custom_call.1} parent=1 // pred_fallthru
      _
    // Predicated region
    $region10: #{tpu_custom_call.1} parent=1 // pred_check
      _
    $region11: #{tpu_custom_call.1} parent=1 // pred_check_branch
      %39 = sbr.rel (0) target = $region13
    $region12: #{tpu_custom_call.1} parent=1 // pred_region
      _
    $region13: #{tpu_custom_call.1} parent=1 // pred_fallthru
      _
    // Predicated region
    $region14: #{tpu_custom_call.1} parent=1 // pred_check
      _
    $region15: #{tpu_custom_call.1} parent=1 // pred_check_branch
      %41 = sbr.rel (0) target = $region17
    $region16: #{tpu_custom_call.1} parent=1 // pred_region
      %s43 = ssub.s32 7168, 7168
      %44 = vsyncadd [#allocation6], %s43
      %s45 = sshll.u32 [#allocation7], 4
      %s46 = int_to_ptr.vmem [resolvable:$true] %s45
      %51 = dma.hbm_to_vmem [thread:$0]  %s3, 7168, %s46, [#allocation6], 256, 256, 16
    $region17: #{tpu_custom_call.1} parent=1 // pred_fallthru
      _
    // Predicated region
    $region18: #{tpu_custom_call.1} parent=1 // pred_check
      _
    $region19: #{tpu_custom_call.1} parent=1 // pred_check_branch
      %53 = sbr.rel (0) target = $region21
    $region20: #{tpu_custom_call.1} parent=1 // pred_region
      _
    $region21: #{tpu_custom_call.1} parent=1 // pred_fallthru
      _
    // Predicated region
    $region22: #{tpu_custom_call.1} parent=1 // pred_check
      _
    $region23: #{tpu_custom_call.1} parent=1 // pred_check_branch
      %55 = sbr.rel (0) target = $region25
    $region24: #{tpu_custom_call.1} parent=1 // pred_region
      %s57 = ssub.s32 3584, 3584
      %58 = vsyncadd [#allocation9], %s57
      %s59 = sshll.u32 [#allocation8], 4
      %s60 = int_to_ptr.vmem [resolvable:$true] %s59
      %65 = dma.hbm_to_vmem [thread:$0]  %s5, 3584, %s60, [#allocation9], 128, 128, 8
    $region25: #{tpu_custom_call.1} parent=1 // pred_fallthru
      _
    // Predicated region
    $region26: #{tpu_custom_call.1} parent=1 // pred_check
      _
    $region27: #{tpu_custom_call.1} parent=1 // pred_check_branch
      %67 = sbr.rel (0) target = $region29
    $region28: #{tpu_custom_call.1} parent=1 // pred_region
      _
    $region29: #{tpu_custom_call.1} parent=1 // pred_fallthru
      _
    // Predicated region
    $region30: #{tpu_custom_call.1} parent=1 // pred_check
      _
    $region31: #{tpu_custom_call.1} parent=1 // pred_check_branch
      %69 = sbr.rel (0) target = $region33
    $region32: #{tpu_custom_call.1} parent=1 // pred_region
      %70 = dma.done [#allocation3], 128
    $region33: #{tpu_custom_call.1} parent=1 // pred_fallthru
      _
    // Predicated region
    $region34: #{tpu_custom_call.1} parent=1 // pred_check
      _
    $region35: #{tpu_custom_call.1} parent=1 // pred_check_branch
      %72 = sbr.rel (0) target = $region37
    $region36: #{tpu_custom_call.1} parent=1 // pred_region
      %73 = dma.done [#allocation6], 2048
    $region37: #{tpu_custom_call.1} parent=1 // pred_fallthru
      _
    // Predicated region
    $region38: #{tpu_custom_call.1} parent=1 // pred_check
      _
    $region39: #{tpu_custom_call.1} parent=1 // pred_check_branch
      %75 = sbr.rel (0) target = $region41
    $region40: #{tpu_custom_call.1} parent=1 // pred_region
      %76 = dma.done [#allocation6], 7168
    $region41: #{tpu_custom_call.1} parent=1 // pred_fallthru
      _
    // Predicated region
    $region42: #{tpu_custom_call.1} parent=1 // pred_check
      _
    $region43: #{tpu_custom_call.1} parent=1 // pred_check_branch
      %78 = sbr.rel (0) target = $region45
    $region44: #{tpu_custom_call.1} parent=1 // pred_region
      %79 = dma.done [#allocation9], 3584
    $region45: #{tpu_custom_call.1} parent=1 // pred_fallthru
      _
    %v80 = vld [vmem:[#allocation2] sm:$0xff]
    %v81 = vld [vmem:[#allocation5] sm:$0xff]
    %v82 = vld [vmem:[#allocation5 + $0x8] sm:$0xff]
    %v83 = vld [vmem:[#allocation5 + $0x10] sm:$0xff]
    %v84 = vld [vmem:[#allocation5 + $0x18] sm:$0xff]
    %v85 = vld [vmem:[#allocation5 + $0x20] sm:$0xff]
    %v86 = vld [vmem:[#allocation5 + $0x28] sm:$0xff]
    %v87 = vld [vmem:[#allocation5 + $0x30] sm:$0xff]
    %v88 = vld [vmem:[#allocation5 + $0x38] sm:$0xff]
    %v89 = vld [vmem:[#allocation5 + $0x40] sm:$0xff]
    %v90 = vld [vmem:[#allocation5 + $0x48] sm:$0xff]
    %v91 = vld [vmem:[#allocation5 + $0x50] sm:$0xff]
    %v92 = vld [vmem:[#allocation5 + $0x58] sm:$0xff]
    %v93 = vld [vmem:[#allocation5 + $0x60] sm:$0xff]
    %v94 = vld [vmem:[#allocation5 + $0x68] sm:$0xff]
    %v95 = vld [vmem:[#allocation5 + $0x70] sm:$0x7f]
    %v96 = vld [vmem:[#allocation5 + $0x78] sm:$0x7f]
    %v97 = vld [vmem:[%s2] sm:$0x3]
    %v99 = vlaneseq
    %v100 = vshrl.u32 %v99, 7
    %v101 = vsub.s32 0, %v100
    %v102 = vrot.slane %v97, %v101
    %v103 = vlaneseq
    %v104 = vshrl.u32 %v103, 7
    %v105 = vsub.s32 1, %v104
    %v106 = vrot.slane %v97, %v105
    %vm109 = vcmask 515072
    %v111 = vsel %vm109, %v80, 0
    %vm113 = vcmask 1046528
    %v115 = vsel %vm113, %v95, 0
    %v118 = vsel %vm113, %v96, 0
    %120 = vmatprep.subr.mxu0 0.0
    %121 = vmatpush1.msra.mxu0 0.0
    %122 = vmatprep.subr.mxu0 0.0
    %123 = vmatpush1.msra.mxu0 0.0
    %124 = vmatprep.subr.mxu0 0.0
    %125 = vmatpush1.msra.mxu0 0.0
    %126 = vmatprep.subr.mxu0 0.0
    %127 = vmatpush1.msra.mxu0 0.0
    %128 = vmatprep.subr.mxu0 0.0
    %129 = vmatpush1.msra.mxu0 0.0
    %130 = vmatprep.subr.mxu0 0.0
    %131 = vmatpush1.msra.mxu0 0.0
    %132 = vmatprep.subr.mxu0 0.0
    %133 = vmatpush1.msra.mxu0 0.0
    %134 = vmatprep.subr.mxu0 0.0
    %135 = vmatpush1.msra.mxu0 0.0
    %136 = vmatprep.subr.mxu0 %v118
    %137 = vmatpush1.msra.mxu0 %v115
    %138 = vmatprep.subr.mxu0 %v94
    %139 = vmatpush1.msra.mxu0 %v93
    %140 = vmatprep.subr.mxu0 %v92
    %141 = vmatpush1.msra.mxu0 %v91
    %142 = vmatprep.subr.mxu0 %v90
    %143 = vmatpush1.msra.mxu0 %v89
    %144 = vmatprep.subr.mxu0 %v88
    %145 = vmatpush1.msra.mxu0 %v87
    %146 = vmatprep.subr.mxu0 %v86
    %147 = vmatpush1.msra.mxu0 %v85
    %148 = vmatprep.subr.mxu0 %v84
    %149 = vmatpush1.msra.mxu0 %v83
    %150 = vmatprep.subr.mxu0 %v82
    %151 = vmatpush1.msra.mxu0 %v81
    %152 = vmatprep.subr.mxu0 0.0
    %153 = vmatpush2.msra.mxu0 0.0
    %154 = vmatprep.subr.mxu0 0.0
    %155 = vmatpush2.msra.mxu0 0.0
    %156 = vmatprep.subr.mxu0 0.0
    %157 = vmatpush2.msra.mxu0 0.0
    %158 = vmatprep.subr.mxu0 0.0
    %159 = vmatpush2.msra.mxu0 0.0
    %160 = vmatprep.subr.mxu0 0.0
    %161 = vmatpush2.msra.mxu0 0.0
    %162 = vmatprep.subr.mxu0 0.0
    %163 = vmatpush2.msra.mxu0 0.0
    %164 = vmatprep.subr.mxu0 0.0
    %165 = vmatpush2.msra.mxu0 0.0
    %166 = vmatprep.subr.mxu0 0.0
    %167 = vmatpush2.msra.mxu0 0.0
    %168 = vmatprep.subr.mxu0 0.0
    %169 = vmatpush2.msra.mxu0 0.0
    %170 = vmatprep.subr.mxu0 0.0
    %171 = vmatpush2.msra.mxu0 0.0
    %172 = vmatprep.subr.mxu0 0.0
    %173 = vmatpush2.msra.mxu0 0.0
    %174 = vmatprep.subr.mxu0 0.0
    %175 = vmatpush2.msra.mxu0 0.0
    %176 = vmatprep.subr.mxu0 0.0
    %177 = vmatpush2.msra.mxu0 0.0
    %178 = vmatprep.subr.mxu0 0.0
    %179 = vmatpush2.msra.mxu0 0.0
    %180 = vmatprep.subr.mxu0 0.0
    %181 = vmatpush2.msra.mxu0 0.0
    %182 = vmatprep.subr.mxu0 0.0
    %183 = vmatpush2.msra.mxu0 0.0
    %184 = vmatprep.mubr.f32.mxu0 0.0
    %185 = vmatmul.mubr.f32.gmra.mxu0 %v111
    %v186 = vpop.f32.mrf.mxu0
    %v187 = vadd.f32 %v102, %v186
    %v188 = vpop.f32.mrf.mxu0
    %v189 = vadd.f32 %v106, %v188
    %190 = vdwg.mxu0
    %v191 = vtanh.pop %v187
    %v192 = vtanh.pop %v189
    %v193 = vld [vmem:[#allocation7] sm:$0xff]
    %v194 = vld [vmem:[#allocation7 + $0x8] sm:$0xff]
    %v195 = vld [vmem:[#allocation7 + $0x10] sm:$0xff]
    %v196 = vld [vmem:[#allocation7 + $0x18] sm:$0xff]
    %v197 = vld [vmem:[#allocation7 + $0x20] sm:$0xff]
    %v198 = vld [vmem:[#allocation7 + $0x28] sm:$0xff]
    %v199 = vld [vmem:[#allocation7 + $0x30] sm:$0xff]
    %v200 = vld [vmem:[#allocation7 + $0x38] sm:$0xff]
    %v201 = vld [vmem:[#allocation7 + $0x40] sm:$0xff]
    %v202 = vld [vmem:[#allocation7 + $0x48] sm:$0xff]
    %v203 = vld [vmem:[#allocation7 + $0x50] sm:$0xff]
    %v204 = vld [vmem:[#allocation7 + $0x58] sm:$0xff]
    %v205 = vld [vmem:[#allocation7 + $0x60] sm:$0xff]
    %v206 = vld [vmem:[#allocation7 + $0x68] sm:$0xff]
    %v207 = vld [vmem:[#allocation7 + $0x70] sm:$0xff]
    %v208 = vld [vmem:[#allocation7 + $0x78] sm:$0xff]
    %v209 = vld [vmem:[#allocation7 + $0x80] sm:$0xff]
    %v210 = vld [vmem:[#allocation7 + $0x88] sm:$0xff]
    %v211 = vld [vmem:[#allocation7 + $0x90] sm:$0xff]
    %v212 = vld [vmem:[#allocation7 + $0x98] sm:$0xff]
    %v213 = vld [vmem:[#allocation7 + $0xa0] sm:$0xff]
    %v214 = vld [vmem:[#allocation7 + $0xa8] sm:$0xff]
    %v215 = vld [vmem:[#allocation7 + $0xb0] sm:$0xff]
    %v216 = vld [vmem:[#allocation7 + $0xb8] sm:$0xff]
    %v217 = vld [vmem:[#allocation7 + $0xc0] sm:$0xff]
    %v218 = vld [vmem:[#allocation7 + $0xc8] sm:$0xff]
    %v219 = vld [vmem:[#allocation7 + $0xd0] sm:$0xff]
    %v220 = vld [vmem:[#allocation7 + $0xd8] sm:$0xff]
    %v221 = vld [vmem:[#allocation7 + $0xe0] sm:$0xff]
    %v222 = vld [vmem:[#allocation7 + $0xe8] sm:$0xff]
    %v223 = vld [vmem:[#allocation7 + $0xf0] sm:$0xff]
    %v224 = vld [vmem:[#allocation7 + $0xf8] sm:$0xff]
    %v225 = vld [vmem:[#allocation7 + $0x100] sm:$0xff]
    %v226 = vld [vmem:[#allocation7 + $0x108] sm:$0xff]
    %v227 = vld [vmem:[#allocation7 + $0x110] sm:$0xff]
    %v228 = vld [vmem:[#allocation7 + $0x118] sm:$0xff]
    %v229 = vld [vmem:[#allocation7 + $0x120] sm:$0xff]
    %v230 = vld [vmem:[#allocation7 + $0x128] sm:$0xff]
    %v231 = vld [vmem:[#allocation7 + $0x130] sm:$0xff]
    %v232 = vld [vmem:[#allocation7 + $0x138] sm:$0xff]
    %v233 = vld [vmem:[#allocation7 + $0x140] sm:$0xff]
    %v234 = vld [vmem:[#allocation7 + $0x148] sm:$0xff]
    %v235 = vld [vmem:[#allocation7 + $0x150] sm:$0xff]
    %v236 = vld [vmem:[#allocation7 + $0x158] sm:$0xff]
    %v237 = vld [vmem:[#allocation7 + $0x160] sm:$0xff]
    %v238 = vld [vmem:[#allocation7 + $0x168] sm:$0xff]
    %v239 = vld [vmem:[#allocation7 + $0x170] sm:$0xff]
    %v240 = vld [vmem:[#allocation7 + $0x178] sm:$0xff]
    %v241 = vld [vmem:[#allocation7 + $0x180] sm:$0xff]
    %v242 = vld [vmem:[#allocation7 + $0x188] sm:$0xff]
    %v243 = vld [vmem:[#allocation7 + $0x190] sm:$0xff]
    %v244 = vld [vmem:[#allocation7 + $0x198] sm:$0xff]
    %v245 = vld [vmem:[#allocation7 + $0x1a0] sm:$0xff]
    %v246 = vld [vmem:[#allocation7 + $0x1a8] sm:$0xff]
    %v247 = vld [vmem:[#allocation7 + $0x1b0] sm:$0xff]
    %v248 = vld [vmem:[#allocation7 + $0x1b8] sm:$0xff]
    %v249 = vld [vmem:[%s4] sm:$0x3]
    %v251 = vlaneseq
    %v252 = vshrl.u32 %v251, 7
    %v253 = vsub.s32 0, %v252
    %v254 = vrot.slane %v249, %v253
    %v255 = vlaneseq
    %v256 = vshrl.u32 %v255, 7
    %v257 = vsub.s32 1, %v256
    %v258 = vrot.slane %v249, %v257
    %vm261 = vcmask 785408
    %v263 = vsel %vm261, %v192, 0
    %265 = vmatprep.subr.mxu0 %v224
    %266 = vmatpush1.msra.mxu0 %v223
    %267 = vmatprep.subr.mxu0 %v222
    %268 = vmatpush1.msra.mxu0 %v221
    %269 = vmatprep.subr.mxu0 %v220
    %270 = vmatpush1.msra.mxu0 %v219
    %271 = vmatprep.subr.mxu0 %v218
    %272 = vmatpush1.msra.mxu0 %v217
    %273 = vmatprep.subr.mxu0 %v216
    %274 = vmatpush1.msra.mxu0 %v215
    %275 = vmatprep.subr.mxu0 %v214
    %276 = vmatpush1.msra.mxu0 %v213
    %277 = vmatprep.subr.mxu0 %v212
    %278 = vmatpush1.msra.mxu0 %v211
    %279 = vmatprep.subr.mxu0 %v210
    %280 = vmatpush1.msra.mxu0 %v209
    %281 = vmatprep.subr.mxu0 %v208
    %282 = vmatpush1.msra.mxu0 %v207
    %283 = vmatprep.subr.mxu0 %v206
    %284 = vmatpush1.msra.mxu0 %v205
    %285 = vmatprep.subr.mxu0 %v204
    %286 = vmatpush1.msra.mxu0 %v203
    %287 = vmatprep.subr.mxu0 %v202
    %288 = vmatpush1.msra.mxu0 %v201
    %289 = vmatprep.subr.mxu0 %v200
    %290 = vmatpush1.msra.mxu0 %v199
    %291 = vmatprep.subr.mxu0 %v198
    %292 = vmatpush1.msra.mxu0 %v197
    %293 = vmatprep.subr.mxu0 %v196
    %294 = vmatpush1.msra.mxu0 %v195
    %295 = vmatprep.subr.mxu0 %v194
    %296 = vmatpush1.msra.mxu0 %v193
    %297 = vmatprep.subr.mxu0 0.0
    %298 = vmatpush2.msra.mxu0 0.0
    %299 = vmatprep.subr.mxu0 0.0
    %300 = vmatpush2.msra.mxu0 0.0
    %301 = vmatprep.subr.mxu0 0.0
    %302 = vmatpush2.msra.mxu0 0.0
    %303 = vmatprep.subr.mxu0 0.0
    %304 = vmatpush2.msra.mxu0 0.0
    %305 = vmatprep.subr.mxu0 %v248
    %306 = vmatpush2.msra.mxu0 %v247
    %307 = vmatprep.subr.mxu0 %v246
    %308 = vmatpush2.msra.mxu0 %v245
    %309 = vmatprep.subr.mxu0 %v244
    %310 = vmatpush2.msra.mxu0 %v243
    %311 = vmatprep.subr.mxu0 %v242
    %312 = vmatpush2.msra.mxu0 %v241
    %313 = vmatprep.subr.mxu0 %v240
    %314 = vmatpush2.msra.mxu0 %v239
    %315 = vmatprep.subr.mxu0 %v238
    %316 = vmatpush2.msra.mxu0 %v237
    %317 = vmatprep.subr.mxu0 %v236
    %318 = vmatpush2.msra.mxu0 %v235
    %319 = vmatprep.subr.mxu0 %v234
    %320 = vmatpush2.msra.mxu0 %v233
    %321 = vmatprep.subr.mxu0 %v232
    %322 = vmatpush2.msra.mxu0 %v231
    %323 = vmatprep.subr.mxu0 %v230
    %324 = vmatpush2.msra.mxu0 %v229
    %325 = vmatprep.subr.mxu0 %v228
    %326 = vmatpush2.msra.mxu0 %v227
    %327 = vmatprep.subr.mxu0 %v226
    %328 = vmatpush2.msra.mxu0 %v225
    %329 = vmatprep.mubr.f32.mxu0 %v263
    %330 = vmatmul.mubr.f32.gmra.mxu0 %v191
    %v331 = vpop.f32.mrf.mxu0
    %v332 = vadd.f32 %v254, %v331
    %v333 = vpop.f32.mrf.mxu0
    %v334 = vadd.f32 %v258, %v333
    %335 = vdwg.mxu0
    %v336 = vtanh.pop %v332
    %v337 = vtanh.pop %v334
    %v338 = vld [vmem:[#allocation8] sm:$0xff]
    %v339 = vld [vmem:[#allocation8 + $0x8] sm:$0xff]
    %v340 = vld [vmem:[#allocation8 + $0x10] sm:$0xff]
    %v341 = vld [vmem:[#allocation8 + $0x18] sm:$0xff]
    %v342 = vld [vmem:[#allocation8 + $0x20] sm:$0xff]
    %v343 = vld [vmem:[#allocation8 + $0x28] sm:$0xff]
    %v344 = vld [vmem:[#allocation8 + $0x30] sm:$0xff]
    %v345 = vld [vmem:[#allocation8 + $0x38] sm:$0xff]
    %v346 = vld [vmem:[#allocation8 + $0x40] sm:$0xff]
    %v347 = vld [vmem:[#allocation8 + $0x48] sm:$0xff]
    %v348 = vld [vmem:[#allocation8 + $0x50] sm:$0xff]
    %v349 = vld [vmem:[#allocation8 + $0x58] sm:$0xff]
    %v350 = vld [vmem:[#allocation8 + $0x60] sm:$0xff]
    %v351 = vld [vmem:[#allocation8 + $0x68] sm:$0xff]
    %v352 = vld [vmem:[#allocation8 + $0x70] sm:$0xff]
    %v353 = vld [vmem:[#allocation8 + $0x78] sm:$0xff]
    %v354 = vld [vmem:[#allocation8 + $0x80] sm:$0xff]
    %v355 = vld [vmem:[#allocation8 + $0x88] sm:$0xff]
    %v356 = vld [vmem:[#allocation8 + $0x90] sm:$0xff]
    %v357 = vld [vmem:[#allocation8 + $0x98] sm:$0xff]
    %v358 = vld [vmem:[#allocation8 + $0xa0] sm:$0xff]
    %v359 = vld [vmem:[#allocation8 + $0xa8] sm:$0xff]
    %v360 = vld [vmem:[#allocation8 + $0xb0] sm:$0xff]
    %v361 = vld [vmem:[#allocation8 + $0xb8] sm:$0xff]
    %v362 = vld [vmem:[#allocation8 + $0xc0] sm:$0xff]
    %v363 = vld [vmem:[#allocation8 + $0xc8] sm:$0xff]
    %v364 = vld [vmem:[#allocation8 + $0xd0] sm:$0xff]
    %v365 = vld [vmem:[#allocation8 + $0xd8] sm:$0xff]
    %v366 = vld [vmem:[%s6] sm:$0x1]
    %v368 = vlaneseq
    %v369 = vshrl.u32 %v368, 7
    %v370 = vsub.s32 0, %v369
    %v371 = vrot.slane %v366, %v370
    %v374 = vsel %vm261, %v337, 0
    %376 = vmatprep.subr.mxu0 0.0
    %377 = vmatpush1.msra.mxu0 %v353
    %378 = vmatprep.subr.mxu0 0.0
    %379 = vmatpush1.msra.mxu0 %v352
    %380 = vmatprep.subr.mxu0 0.0
    %381 = vmatpush1.msra.mxu0 %v351
    %382 = vmatprep.subr.mxu0 0.0
    %383 = vmatpush1.msra.mxu0 %v350
    %384 = vmatprep.subr.mxu0 0.0
    %385 = vmatpush1.msra.mxu0 %v349
    %386 = vmatprep.subr.mxu0 0.0
    %387 = vmatpush1.msra.mxu0 %v348
    %388 = vmatprep.subr.mxu0 0.0
    %389 = vmatpush1.msra.mxu0 %v347
    %390 = vmatprep.subr.mxu0 0.0
    %391 = vmatpush1.msra.mxu0 %v346
    %392 = vmatprep.subr.mxu0 0.0
    %393 = vmatpush1.msra.mxu0 %v345
    %394 = vmatprep.subr.mxu0 0.0
    %395 = vmatpush1.msra.mxu0 %v344
    %396 = vmatprep.subr.mxu0 0.0
    %397 = vmatpush1.msra.mxu0 %v343
    %398 = vmatprep.subr.mxu0 0.0
    %399 = vmatpush1.msra.mxu0 %v342
    %400 = vmatprep.subr.mxu0 0.0
    %401 = vmatpush1.msra.mxu0 %v341
    %402 = vmatprep.subr.mxu0 0.0
    %403 = vmatpush1.msra.mxu0 %v340
    %404 = vmatprep.subr.mxu0 0.0
    %405 = vmatpush1.msra.mxu0 %v339
    %406 = vmatprep.subr.mxu0 0.0
    %407 = vmatpush1.msra.mxu0 %v338
    %408 = vmatprep.subr.mxu0 0.0
    %409 = vmatpush2.msra.mxu0 0.0
    %410 = vmatprep.subr.mxu0 0.0
    %411 = vmatpush2.msra.mxu0 0.0
    %412 = vmatprep.subr.mxu0 0.0
    %413 = vmatpush2.msra.mxu0 0.0
    %414 = vmatprep.subr.mxu0 0.0
    %415 = vmatpush2.msra.mxu0 0.0
    %416 = vmatprep.subr.mxu0 0.0
    %417 = vmatpush2.msra.mxu0 %v365
    %418 = vmatprep.subr.mxu0 0.0
    %419 = vmatpush2.msra.mxu0 %v364
    %420 = vmatprep.subr.mxu0 0.0
    %421 = vmatpush2.msra.mxu0 %v363
    %422 = vmatprep.subr.mxu0 0.0
    %423 = vmatpush2.msra.mxu0 %v362
    %424 = vmatprep.subr.mxu0 0.0
    %425 = vmatpush2.msra.mxu0 %v361
    %426 = vmatprep.subr.mxu0 0.0
    %427 = vmatpush2.msra.mxu0 %v360
    %428 = vmatprep.subr.mxu0 0.0
    %429 = vmatpush2.msra.mxu0 %v359
    %430 = vmatprep.subr.mxu0 0.0
    %431 = vmatpush2.msra.mxu0 %v358
    %432 = vmatprep.subr.mxu0 0.0
    %433 = vmatpush2.msra.mxu0 %v357
    %434 = vmatprep.subr.mxu0 0.0
    %435 = vmatpush2.msra.mxu0 %v356
    %436 = vmatprep.subr.mxu0 0.0
    %437 = vmatpush2.msra.mxu0 %v355
    %438 = vmatprep.subr.mxu0 0.0
    %439 = vmatpush2.msra.mxu0 %v354
    %440 = vmatprep.mubr.f32.mxu0 %v374
    %441 = vmatmul.mubr.f32.gmra.mxu0 %v336
    %v442 = vpop.f32.mrf.mxu0
    %v443 = vadd.f32 %v371, %v442
    %v444 = vpop.f32.mrf.mxu0
    %445 = vdwg.mxu0
    %446 = vst [vmem:[#allocation10] sm:$0xff] %v443
    // Predicated region
    $region46: #{tpu_custom_call.1} parent=1 // pred_check
      _
    $region47: #{tpu_custom_call.1} parent=1 // pred_check_branch
      %448 = sbr.rel (0) target = $region49
    $region48: #{tpu_custom_call.1} parent=1 // pred_region
      %s450 = ssub.s32 128, 128
      %451 = vsyncadd [#allocation4], %s450
      %s453 = sshll.u32 [#allocation10], 4
      %s454 = int_to_ptr.vmem [resolvable:$true] %s453
      %456 = dma.vmem_to_hbm [thread:$0]  %s454, 128, %s7, [#allocation4]
    $region49: #{tpu_custom_call.1} parent=1 // pred_fallthru
      _
    // Predicated region
    $region50: #{tpu_custom_call.1} parent=1 // pred_check
      _
    $region51: #{tpu_custom_call.1} parent=1 // pred_check_branch
      %458 = sbr.rel (0) target = $region53
    $region52: #{tpu_custom_call.1} parent=1 // pred_region
      %459 = dma.done [#allocation4], 128
    $region53: #{tpu_custom_call.1} parent=1 // pred_fallthru
      _
    %460 = vsyncpa [#allocation3], 1
    %461 = vsyncpa [#allocation6], 1
    %462 = vsyncpa [#allocation9], 1
    %463 = vsyncpa [#allocation4], 1

</llo_original>
